<compile_context>
chip_gen: v5e
topology: v5e:2x2
jax: 0.10.0
libtpu: 0.0.40
codegen_flags: <defaults>
</compile_context>

<pallas_src>
import functools

import jax
import jax.numpy as jnp
import numpy as np
from jax.experimental import pallas as pl
from jax.experimental.pallas import tpu as pltpu


def _round_up(v, m):
    return (v + m - 1) // m * m


# --------------------------------------------------------------------------
# Stage 1: h1 = relu(adj @ (x W1 + b1))   and   h2_lin = h1 W2 + b2
#   (bias b1 is folded into W1_aug via the ones-column in x_aug)
# --------------------------------------------------------------------------
def _layer1_kernel(adj_ref, x_ref, w1_ref, w2_ref, b2_ref,
                   h1_ref, h2_lin_ref, acc_ref):
    k = pl.program_id(1)

    @pl.when(k == 0)
    def _init():
        acc_ref[...] = jnp.zeros_like(acc_ref)

    # accumulate (adj @ x_aug) over the node (contraction) axis
    acc_ref[...] += jnp.dot(adj_ref[...], x_ref[...],
                            preferred_element_type=jnp.float32)

    @pl.when(k == pl.num_programs(1) - 1)
    def _finalize():
        ax = acc_ref[...].astype(w1_ref.dtype)
        # (adj @ x_aug) @ W1_aug  ==  adj @ (x @ W1 + b1)   (exact reassociation)
        h1 = jnp.maximum(
            jnp.dot(ax, w1_ref[...], preferred_element_type=jnp.float32), 0.0)
        h1_ref[...] = h1.astype(h1_ref.dtype)
        h2_lin = jnp.dot(h1.astype(w2_ref.dtype), w2_ref[...],
                         preferred_element_type=jnp.float32)
        h2_lin = h2_lin + b2_ref[...].astype(jnp.float32)
        h2_lin_ref[...] = h2_lin.astype(h2_lin_ref.dtype)


# --------------------------------------------------------------------------
# Stage 2: h2 = relu(adj @ h2_lin),  logits = (h1 + h2) @ Wo + bo
# --------------------------------------------------------------------------
def _layer2_out_kernel(adj_ref, h2_lin_ref, h1_ref, wo_ref, bo_ref,
                       out_ref, acc_ref):
    k = pl.program_id(1)

    @pl.when(k == 0)
    def _init():
        acc_ref[...] = jnp.zeros_like(acc_ref)

    acc_ref[...] += jnp.dot(adj_ref[...], h2_lin_ref[...],
                            preferred_element_type=jnp.float32)

    @pl.when(k == pl.num_programs(1) - 1)
    def _finalize():
        h2 = jnp.maximum(acc_ref[...], 0.0)
        added = h1_ref[...].astype(jnp.float32) + h2
        logits = jnp.dot(added.astype(wo_ref.dtype), wo_ref[...],
                         preferred_element_type=jnp.float32)
        logits = logits + bo_ref[...].astype(jnp.float32)
        out_ref[...] = logits.astype(out_ref.dtype)


def gcn_forward(x, adj, w1, b1, w2, b2, wo, bo, *,
                tile_m=128, tile_k=128, compute_dtype=jnp.float32):
    """GCN forward.  Weights are (in_features, out_features); biases (1, out)."""
    n, c = x.shape
    h = w1.shape[1]
    k_out = wo.shape[1]

    lane = 128
    c_pad = _round_up(c + 1, lane)          # +1 column carries the layer-1 bias
    h_pad = _round_up(h, lane)
    k_pad = _round_up(k_out, lane)
    n_pad = _round_up(n, max(tile_m, tile_k))
    tile_m = min(tile_m, n_pad)
    tile_k = min(tile_k, n_pad)

    cdt = compute_dtype

    # ---- zero-pad everything to lane-dense (multiple-of-128) shapes ----------
    x_aug = jnp.zeros((n_pad, c_pad), cdt)
    x_aug = x_aug.at[:n, :c].set(x.astype(cdt))
    x_aug = x_aug.at[:n, c].set(jnp.asarray(1.0, cdt))          # ones (bias) column

    adj_p = jnp.zeros((n_pad, n_pad), cdt).at[:n, :n].set(adj.astype(cdt))

    w1_aug = jnp.zeros((c_pad, h_pad), cdt)
    w1_aug = w1_aug.at[:c, :h].set(w1.astype(cdt))
    w1_aug = w1_aug.at[c, :h].set(b1.reshape(-1).astype(cdt))   # b1 as extra row

    w2_p = jnp.zeros((h_pad, h_pad), cdt).at[:h, :h].set(w2.astype(cdt))
    b2_p = jnp.zeros((1, h_pad), cdt).at[0, :h].set(b2.reshape(-1).astype(cdt))

    wo_p = jnp.zeros((h_pad, k_pad), cdt).at[:h, :k_out].set(wo.astype(cdt))
    bo_p = jnp.zeros((1, k_pad), jnp.float32).at[0, :k_out].set(
        bo.reshape(-1).astype(jnp.float32))

    grid = (n_pad // tile_m, n_pad // tile_k)
    cparams = pltpu.CompilerParams(
        dimension_semantics=("parallel", "arbitrary"),
        vmem_limit_bytes=32 * 1024 * 1024,
    )

    # ---- stage 1 --------------------------------------------------------------
    h1_p, h2_lin_p = pl.pallas_call(
        _layer1_kernel,
        out_shape=(jax.ShapeDtypeStruct((n_pad, h_pad), cdt),
                   jax.ShapeDtypeStruct((n_pad, h_pad), cdt)),
        grid_spec=pltpu.PrefetchScalarGridSpec(
            num_scalar_prefetch=0,
            grid=grid,
            in_specs=[
                pl.BlockSpec((tile_m, tile_k), lambda i, k: (i, k)),   # adj
                pl.BlockSpec((tile_k, c_pad), lambda i, k: (k, 0)),    # x_aug
                pl.BlockSpec((c_pad, h_pad), lambda i, k: (0, 0)),     # W1_aug
                pl.BlockSpec((h_pad, h_pad), lambda i, k: (0, 0)),     # W2
                pl.BlockSpec((1, h_pad), lambda i, k: (0, 0)),         # b2
            ],
            out_specs=(
                pl.BlockSpec((tile_m, h_pad), lambda i, k: (i, 0)),    # h1
                pl.BlockSpec((tile_m, h_pad), lambda i, k: (i, 0)),    # h2_lin
            ),
            scratch_shapes=[pltpu.VMEM((tile_m, c_pad), jnp.float32)],
        ),
        compiler_params=cparams,
    )(adj_p, x_aug, w1_aug, w2_p, b2_p)

    # ---- stage 2 --------------------------------------------------------------
    logits_p = pl.pallas_call(
        _layer2_out_kernel,
        out_shape=jax.ShapeDtypeStruct((n_pad, k_pad), jnp.float32),
        grid_spec=pltpu.PrefetchScalarGridSpec(
            num_scalar_prefetch=0,
            grid=grid,
            in_specs=[
                pl.BlockSpec((tile_m, tile_k), lambda i, k: (i, k)),   # adj
                pl.BlockSpec((tile_k, h_pad), lambda i, k: (k, 0)),    # h2_lin
                pl.BlockSpec((tile_m, h_pad), lambda i, k: (i, 0)),    # h1 (skip)
                pl.BlockSpec((h_pad, k_pad), lambda i, k: (0, 0)),     # Wo
                pl.BlockSpec((1, k_pad), lambda i, k: (0, 0)),         # bo
            ],
            out_specs=pl.BlockSpec((tile_m, k_pad), lambda i, k: (i, 0)),
            scratch_shapes=[pltpu.VMEM((tile_m, h_pad), jnp.float32)],
        ),
        compiler_params=cparams,
    )(adj_p, h2_lin_p, h1_p, wo_p, bo_p)

    return logits_p[:n, :k_out]


def init_params(key, in_channels, hidden_units, K):
    """Deterministic init mirroring the PyTorch module's __init__."""
    k1, k2, k3, k4, k5, k6 = jax.random.split(key, 6)

    def linear_init(kw, kb, fan_in, fan_out):
        bound = 1.0 / np.sqrt(fan_in)
        w = jax.random.uniform(kw, (fan_in, fan_out), jnp.float32, -bound, bound)
        b = jax.random.uniform(kb, (1, fan_out), jnp.float32, -bound, bound)
        return w, b

    w1, b1 = linear_init(k1, k2, in_channels, hidden_units)
    w2, b2 = linear_init(k3, k4, hidden_units, hidden_units)
    # out layer: weight overridden with N(0, 1); bias keeps default uniform init
    wo = jax.random.normal(k5, (hidden_units, K), jnp.float32)
    bo_bound = 1.0 / np.sqrt(hidden_units)
    bo = jax.random.uniform(k6, (1, K), jnp.float32, -bo_bound, bo_bound)
    return w1, b1, w2, b2, wo, bo


def gcn_reference(x, adj, w1, b1, w2, b2, wo, bo):
    """Pure-JAX reference, faithful to the PyTorch module's forward()."""
    h1 = jnp.maximum(adj @ (x @ w1 + b1), 0.0)
    h2 = jnp.maximum(adj @ (h1 @ w2 + b2), 0.0)
    return (h1 + h2) @ wo + bo


if __name__ == "__main__":
    key = jax.random.PRNGKey(0)
    kx, kadj, kp = jax.random.split(key, 3)

    N = 16              # number of graph nodes
    in_channels = 8
    hidden_units = 32
    K = 4               # number of output classes

    x = jax.random.normal(kx, (N, in_channels), jnp.float32)

    # symmetric, row-normalized adjacency (synthetic)
    a = jax.random.uniform(kadj, (N, N), jnp.float32)
    a = (a + a.T) * 0.5 + jnp.eye(N, dtype=jnp.float32)
    adj = a / jnp.sum(a, axis=1, keepdims=True)

    params = init_params(kp, in_channels, hidden_units, K)

    fwd = jax.jit(gcn_forward, static_argnames=("tile_m", "tile_k", "compute_dtype"))
    logits = fwd(x, adj, *params)
    jax.block_until_ready(logits)

    ref = gcn_reference(x, adj, *params)
    np.testing.assert_allclose(np.asarray(logits), np.asarray(ref),
                               rtol=1e-4, atol=1e-5)
    print("KERNEL_OK")
</pallas_src>

<mosaic_0001>
module attributes {stable_mosaic.version = 11 : i64} {
  func.func @_layer1_kernel(%arg0: i32, %arg1: i32, %arg2: memref<128x128xf32, #tpu.memory_space<vmem>>, %arg3: memref<128x128xf32, #tpu.memory_space<vmem>>, %arg4: memref<128x128xf32, #tpu.memory_space<vmem>>, %arg5: memref<128x128xf32, #tpu.memory_space<vmem>>, %arg6: memref<1x128xf32, #tpu.memory_space<vmem>>, %arg7: memref<128x128xf32, #tpu.memory_space<vmem>>, %arg8: memref<128x128xf32, #tpu.memory_space<vmem>>, %arg9: memref<128x128xf32, #tpu.memory_space<vmem>>) attributes {dimension_semantics = [#tpu.dimension_semantics<parallel>, #tpu.dimension_semantics<arbitrary>], iteration_bounds = array<i64: 1, 1>, scalar_prefetch = 0 : i64, scratch_operands = 1 : i64, tpu.core_type = #tpu.core_type<tc>, window_params = [{transform_indices = @transform_0, window_bounds = array<i64: 128, 128>}, {transform_indices = @transform_1, window_bounds = array<i64: 128, 128>}, {pipeline_mode = #tpu.pipeline_mode<synchronous>, transform_indices = @transform_2, window_bounds = array<i64: 128, 128>}, {pipeline_mode = #tpu.pipeline_mode<synchronous>, transform_indices = @transform_3, window_bounds = array<i64: 128, 128>}, {pipeline_mode = #tpu.pipeline_mode<synchronous>, transform_indices = @transform_4, window_bounds = array<i64: 1, 128>}, {transform_indices = @transform_5, window_bounds = array<i64: 128, 128>}, {transform_indices = @transform_6, window_bounds = array<i64: 128, 128>}]} {
    %c0_i32 = arith.constant 0 : i32
    %0 = arith.cmpi eq, %arg1, %c0_i32 : i32
    %1 = arith.extui %0 : i1 to i32
    %c0_i32_0 = arith.constant 0 : i32
    %2 = arith.cmpi ne, %1, %c0_i32_0 : i32
    scf.if %2 {
      %cst_10 = arith.constant 0.000000e+00 : f32
      %12 = vector.broadcast %cst_10 : f32 to vector<128x128xf32>
      %c0_11 = arith.constant 0 : index
      %c0_12 = arith.constant 0 : index
      %13 = vector.load %arg9[%c0_11, %c0_12] : memref<128x128xf32, #tpu.memory_space<vmem>>, vector<128x128xf32>
      tpu.vector_store %arg9[%c0_11, %c0_12], %12 {strides = array<i32>} : memref<128x128xf32, #tpu.memory_space<vmem>>, vector<128x128xf32>,
    } else {
    }
    %c0 = arith.constant 0 : index
    %c0_1 = arith.constant 0 : index
    %3 = vector.load %arg9[%c0, %c0_1] : memref<128x128xf32, #tpu.memory_space<vmem>>, vector<128x128xf32>
    %c0_2 = arith.constant 0 : index
    %c0_3 = arith.constant 0 : index
    %4 = vector.load %arg2[%c0_2, %c0_3] : memref<128x128xf32, #tpu.memory_space<vmem>>, vector<128x128xf32>
    %c0_4 = arith.constant 0 : index
    %c0_5 = arith.constant 0 : index
    %5 = vector.load %arg3[%c0_4, %c0_5] : memref<128x128xf32, #tpu.memory_space<vmem>>, vector<128x128xf32>
    %cst = arith.constant dense<0.000000e+00> : vector<128x128xf32>
    %6 = tpu.matmul %4, %5, %cst {dimension_numbers = #tpu.dot_dimension_numbers<[1], [0], [0], [1], [0, 0, 1, 1], [], []>} : vector<128x128xf32>, vector<128x128xf32>, vector<128x128xf32> -> vector<128x128xf32>
    %7 = arith.addf %3, %6 : vector<128x128xf32>
    %c0_6 = arith.constant 0 : index
    %c0_7 = arith.constant 0 : index
    %8 = vector.load %arg9[%c0_6, %c0_7] : memref<128x128xf32, #tpu.memory_space<vmem>>, vector<128x128xf32>
    tpu.vector_store %arg9[%c0_6, %c0_7], %7 {strides = array<i32>} : memref<128x128xf32, #tpu.memory_space<vmem>>, vector<128x128xf32>,
    %c0_i32_8 = arith.constant 0 : i32
    %9 = arith.cmpi eq, %arg1, %c0_i32_8 : i32
    %10 = arith.extui %9 : i1 to i32
    %c0_i32_9 = arith.constant 0 : i32
    %11 = arith.cmpi ne, %10, %c0_i32_9 : i32
    scf.if %11 {
      %c0_10 = arith.constant 0 : index
      %c0_11 = arith.constant 0 : index
      %12 = vector.load %arg9[%c0_10, %c0_11] : memref<128x128xf32, #tpu.memory_space<vmem>>, vector<128x128xf32>
      %c0_12 = arith.constant 0 : index
      %c0_13 = arith.constant 0 : index
      %13 = vector.load %arg4[%c0_12, %c0_13] : memref<128x128xf32, #tpu.memory_space<vmem>>, vector<128x128xf32>
      %cst_14 = arith.constant dense<0.000000e+00> : vector<128x128xf32>
      %14 = tpu.matmul %12, %13, %cst_14 {dimension_numbers = #tpu.dot_dimension_numbers<[1], [0], [0], [1], [0, 0, 1, 1], [], []>} : vector<128x128xf32>, vector<128x128xf32>, vector<128x128xf32> -> vector<128x128xf32>
      %cst_15 = arith.constant 0.000000e+00 : f32
      %15 = vector.broadcast %cst_15 : f32 to vector<128x128xf32>
      %16 = arith.maximumf %14, %15 : vector<128x128xf32>
      %c0_16 = arith.constant 0 : index
      %c0_17 = arith.constant 0 : index
      %17 = vector.load %arg7[%c0_16, %c0_17] : memref<128x128xf32, #tpu.memory_space<vmem>>, vector<128x128xf32>
      tpu.vector_store %arg7[%c0_16, %c0_17], %16 {strides = array<i32>} : memref<128x128xf32, #tpu.memory_space<vmem>>, vector<128x128xf32>,
      %c0_18 = arith.constant 0 : index
      %c0_19 = arith.constant 0 : index
      %18 = vector.load %arg5[%c0_18, %c0_19] : memref<128x128xf32, #tpu.memory_space<vmem>>, vector<128x128xf32>
      %cst_20 = arith.constant dense<0.000000e+00> : vector<128x128xf32>
      %19 = tpu.matmul %16, %18, %cst_20 {dimension_numbers = #tpu.dot_dimension_numbers<[1], [0], [0], [1], [0, 0, 1, 1], [], []>} : vector<128x128xf32>, vector<128x128xf32>, vector<128x128xf32> -> vector<128x128xf32>
      %c0_21 = arith.constant 0 : index
      %c0_22 = arith.constant 0 : index
      %20 = vector.load %arg6[%c0_21, %c0_22] : memref<1x128xf32, #tpu.memory_space<vmem>>, vector<1x128xf32>
      %21 = vector.broadcast %20 : vector<1x128xf32> to vector<128x128xf32>
      %22 = arith.addf %19, %21 : vector<128x128xf32>
      %c0_23 = arith.constant 0 : index
      %c0_24 = arith.constant 0 : index
      %23 = vector.load %arg8[%c0_23, %c0_24] : memref<128x128xf32, #tpu.memory_space<vmem>>, vector<128x128xf32>
      tpu.vector_store %arg8[%c0_23, %c0_24], %22 {strides = array<i32>} : memref<128x128xf32, #tpu.memory_space<vmem>>, vector<128x128xf32>,
    } else {
    }
    return
  }
  func.func @transform_0(%arg0: i32, %arg1: i32) -> (i32, i32) {
    %c0_i32 = arith.constant 0 : i32
    return %arg0, %arg1 : i32, i32
  }
  func.func @transform_1(%arg0: i32, %arg1: i32) -> (i32, i32) {
    %c0_i32 = arith.constant 0 : i32
    %c0_i32_0 = arith.constant 0 : i32
    return %arg1, %c0_i32 : i32, i32
  }
  func.func @transform_2(%arg0: i32, %arg1: i32) -> (i32, i32) {
    %c0_i32 = arith.constant 0 : i32
    %c0_i32_0 = arith.constant 0 : i32
    %c0_i32_1 = arith.constant 0 : i32
    return %c0_i32, %c0_i32_0 : i32, i32
  }
  func.func @transform_3(%arg0: i32, %arg1: i32) -> (i32, i32) {
    %c0_i32 = arith.constant 0 : i32
    %c0_i32_0 = arith.constant 0 : i32
    %c0_i32_1 = arith.constant 0 : i32
    return %c0_i32, %c0_i32_0 : i32, i32
  }
  func.func @transform_4(%arg0: i32, %arg1: i32) -> (i32, i32) {
    %c0_i32 = arith.constant 0 : i32
    %c0_i32_0 = arith.constant 0 : i32
    %c0_i32_1 = arith.constant 0 : i32
    return %c0_i32, %c0_i32_0 : i32, i32
  }
  func.func @transform_5(%arg0: i32, %arg1: i32) -> (i32, i32) {
    %c0_i32 = arith.constant 0 : i32
    %c0_i32_0 = arith.constant 0 : i32
    return %arg0, %c0_i32 : i32, i32
  }
  func.func @transform_6(%arg0: i32, %arg1: i32) -> (i32, i32) {
    %c0_i32 = arith.constant 0 : i32
    %c0_i32_0 = arith.constant 0 : i32
    return %arg0, %c0_i32 : i32, i32
  }
}

module attributes {stable_mosaic.version = 11 : i64} {
  func.func @_layer2_out_kernel(%arg0: i32, %arg1: i32, %arg2: memref<128x128xf32, #tpu.memory_space<vmem>>, %arg3: memref<128x128xf32, #tpu.memory_space<vmem>>, %arg4: memref<128x128xf32, #tpu.memory_space<vmem>>, %arg5: memref<128x128xf32, #tpu.memory_space<vmem>>, %arg6: memref<1x128xf32, #tpu.memory_space<vmem>>, %arg7: memref<128x128xf32, #tpu.memory_space<vmem>>, %arg8: memref<128x128xf32, #tpu.memory_space<vmem>>) attributes {dimension_semantics = [#tpu.dimension_semantics<parallel>, #tpu.dimension_semantics<arbitrary>], iteration_bounds = array<i64: 1, 1>, scalar_prefetch = 0 : i64, scratch_operands = 1 : i64, tpu.core_type = #tpu.core_type<tc>, window_params = [{transform_indices = @transform_0, window_bounds = array<i64: 128, 128>}, {transform_indices = @transform_1, window_bounds = array<i64: 128, 128>}, {transform_indices = @transform_2, window_bounds = array<i64: 128, 128>}, {pipeline_mode = #tpu.pipeline_mode<synchronous>, transform_indices = @transform_3, window_bounds = array<i64: 128, 128>}, {pipeline_mode = #tpu.pipeline_mode<synchronous>, transform_indices = @transform_4, window_bounds = array<i64: 1, 128>}, {transform_indices = @transform_5, window_bounds = array<i64: 128, 128>}]} {
    %c0_i32 = arith.constant 0 : i32
    %0 = arith.cmpi eq, %arg1, %c0_i32 : i32
    %1 = arith.extui %0 : i1 to i32
    %c0_i32_0 = arith.constant 0 : i32
    %2 = arith.cmpi ne, %1, %c0_i32_0 : i32
    scf.if %2 {
      %cst_10 = arith.constant 0.000000e+00 : f32
      %12 = vector.broadcast %cst_10 : f32 to vector<128x128xf32>
      %c0_11 = arith.constant 0 : index
      %c0_12 = arith.constant 0 : index
      %13 = vector.load %arg8[%c0_11, %c0_12] : memref<128x128xf32, #tpu.memory_space<vmem>>, vector<128x128xf32>
      tpu.vector_store %arg8[%c0_11, %c0_12], %12 {strides = array<i32>} : memref<128x128xf32, #tpu.memory_space<vmem>>, vector<128x128xf32>,
    } else {
    }
    %c0 = arith.constant 0 : index
    %c0_1 = arith.constant 0 : index
    %3 = vector.load %arg8[%c0, %c0_1] : memref<128x128xf32, #tpu.memory_space<vmem>>, vector<128x128xf32>
    %c0_2 = arith.constant 0 : index
    %c0_3 = arith.constant 0 : index
    %4 = vector.load %arg2[%c0_2, %c0_3] : memref<128x128xf32, #tpu.memory_space<vmem>>, vector<128x128xf32>
    %c0_4 = arith.constant 0 : index
    %c0_5 = arith.constant 0 : index
    %5 = vector.load %arg3[%c0_4, %c0_5] : memref<128x128xf32, #tpu.memory_space<vmem>>, vector<128x128xf32>
    %cst = arith.constant dense<0.000000e+00> : vector<128x128xf32>
    %6 = tpu.matmul %4, %5, %cst {dimension_numbers = #tpu.dot_dimension_numbers<[1], [0], [0], [1], [0, 0, 1, 1], [], []>} : vector<128x128xf32>, vector<128x128xf32>, vector<128x128xf32> -> vector<128x128xf32>
    %7 = arith.addf %3, %6 : vector<128x128xf32>
    %c0_6 = arith.constant 0 : index
    %c0_7 = arith.constant 0 : index
    %8 = vector.load %arg8[%c0_6, %c0_7] : memref<128x128xf32, #tpu.memory_space<vmem>>, vector<128x128xf32>
    tpu.vector_store %arg8[%c0_6, %c0_7], %7 {strides = array<i32>} : memref<128x128xf32, #tpu.memory_space<vmem>>, vector<128x128xf32>,
    %c0_i32_8 = arith.constant 0 : i32
    %9 = arith.cmpi eq, %arg1, %c0_i32_8 : i32
    %10 = arith.extui %9 : i1 to i32
    %c0_i32_9 = arith.constant 0 : i32
    %11 = arith.cmpi ne, %10, %c0_i32_9 : i32
    scf.if %11 {
      %c0_10 = arith.constant 0 : index
      %c0_11 = arith.constant 0 : index
      %12 = vector.load %arg8[%c0_10, %c0_11] : memref<128x128xf32, #tpu.memory_space<vmem>>, vector<128x128xf32>
      %cst_12 = arith.constant 0.000000e+00 : f32
      %13 = vector.broadcast %cst_12 : f32 to vector<128x128xf32>
      %14 = arith.maximumf %12, %13 : vector<128x128xf32>
      %c0_13 = arith.constant 0 : index
      %c0_14 = arith.constant 0 : index
      %15 = vector.load %arg4[%c0_13, %c0_14] : memref<128x128xf32, #tpu.memory_space<vmem>>, vector<128x128xf32>
      %16 = arith.addf %15, %14 : vector<128x128xf32>
      %c0_15 = arith.constant 0 : index
      %c0_16 = arith.constant 0 : index
      %17 = vector.load %arg5[%c0_15, %c0_16] : memref<128x128xf32, #tpu.memory_space<vmem>>, vector<128x128xf32>
      %cst_17 = arith.constant dense<0.000000e+00> : vector<128x128xf32>
      %18 = tpu.matmul %16, %17, %cst_17 {dimension_numbers = #tpu.dot_dimension_numbers<[1], [0], [0], [1], [0, 0, 1, 1], [], []>} : vector<128x128xf32>, vector<128x128xf32>, vector<128x128xf32> -> vector<128x128xf32>
      %c0_18 = arith.constant 0 : index
      %c0_19 = arith.constant 0 : index
      %19 = vector.load %arg6[%c0_18, %c0_19] : memref<1x128xf32, #tpu.memory_space<vmem>>, vector<1x128xf32>
      %20 = vector.broadcast %19 : vector<1x128xf32> to vector<128x128xf32>
      %21 = arith.addf %18, %20 : vector<128x128xf32>
      %c0_20 = arith.constant 0 : index
      %c0_21 = arith.constant 0 : index
      %22 = vector.load %arg7[%c0_20, %c0_21] : memref<128x128xf32, #tpu.memory_space<vmem>>, vector<128x128xf32>
      tpu.vector_store %arg7[%c0_20, %c0_21], %21 {strides = array<i32>} : memref<128x128xf32, #tpu.memory_space<vmem>>, vector<128x128xf32>,
    } else {
    }
    return
  }
  func.func @transform_0(%arg0: i32, %arg1: i32) -> (i32, i32) {
    %c0_i32 = arith.constant 0 : i32
    return %arg0, %arg1 : i32, i32
  }
  func.func @transform_1(%arg0: i32, %arg1: i32) -> (i32, i32) {
    %c0_i32 = arith.constant 0 : i32
    %c0_i32_0 = arith.constant 0 : i32
    return %arg1, %c0_i32 : i32, i32
  }
  func.func @transform_2(%arg0: i32, %arg1: i32) -> (i32, i32) {
    %c0_i32 = arith.constant 0 : i32
    %c0_i32_0 = arith.constant 0 : i32
    return %arg0, %c0_i32 : i32, i32
  }
  func.func @transform_3(%arg0: i32, %arg1: i32) -> (i32, i32) {
    %c0_i32 = arith.constant 0 : i32
    %c0_i32_0 = arith.constant 0 : i32
    %c0_i32_1 = arith.constant 0 : i32
    return %c0_i32, %c0_i32_0 : i32, i32
  }
  func.func @transform_4(%arg0: i32, %arg1: i32) -> (i32, i32) {
    %c0_i32 = arith.constant 0 : i32
    %c0_i32_0 = arith.constant 0 : i32
    %c0_i32_1 = arith.constant 0 : i32
    return %c0_i32, %c0_i32_0 : i32, i32
  }
  func.func @transform_5(%arg0: i32, %arg1: i32) -> (i32, i32) {
    %c0_i32 = arith.constant 0 : i32
    %c0_i32_0 = arith.constant 0 : i32
    return %arg0, %c0_i32 : i32, i32
  }
}

</mosaic_0001>

<llo_original>
// kernel: gcn_forward.2
$region0: #{gcn_forward.2}
  #allocation0 [shape = 'u32[]', space=smem, size = 0x4, offset = 0x4, fixed_abs, tag = 'smem constant byte address 0x4 - core index']
  #allocation1 [shape = 'u32[72,128]{1,0:T(1,128)}', space=vmem, size = 0x9000, scoped, tag = 'internal scratch']
  #allocation2 [shape = 'f32[128,128]{1,0:T(8,128)}', space=vmem, size = 0x10000, scoped, tag = 'scratch operand']
  %s0 = inlined_call_operand.vmem [shape: f32[128,128], index: 0, kind: input, shape index: {}]
  %s1 = inlined_call_operand.vmem [shape: f32[128,128], index: 1, kind: input, shape index: {}]
  %s2 = inlined_call_operand.vmem [shape: f32[128,128], index: 2, kind: input, shape index: {}]
  %s3 = inlined_call_operand.vmem [shape: f32[128,128], index: 3, kind: input, shape index: {}]
  %s4 = inlined_call_operand.vmem [shape: f32[1,128], index: 4, kind: input, shape index: {}]
  %s5 = inlined_call_operand.vmem [shape: f32[128,128], index: 5, kind: output, shape index: {0}]
  %s6 = inlined_call_operand.vmem [shape: f32[128,128], index: 6, kind: output, shape index: {1}]
  %7 = xla_tuple %s5, %s6
  %s8 = sld [smem:[#allocation0]]
  $region46: #{gcn_forward.2} parent=0
    _
  %s10 = ssub.s32 1, %s8
  %s11 = scalar_select 0, %s10, %s8
  // Predicated region
  $region2: #{gcn_forward.2} parent=0 // pred_check
    _
  $region3: #{gcn_forward.2} parent=0 // pred_check_branch
    %13 = sbr.rel (0) target = $region5
  $region4: #{gcn_forward.2} parent=0 // pred_region
    _
  $region5: #{gcn_forward.2} parent=0 // pred_fallthru
    _
  // Predicated region
  $region6: #{gcn_forward.2} parent=0 // pred_check
    _
  $region7: #{gcn_forward.2} parent=0 // pred_check_branch
    %15 = sbr.rel (0) target = $region9
  $region8: #{gcn_forward.2} parent=0 // pred_region
    _
  $region9: #{gcn_forward.2} parent=0 // pred_fallthru
    _
  // Predicated region
  $region10: #{gcn_forward.2} parent=0 // pred_check
    _
  $region11: #{gcn_forward.2} parent=0 // pred_check_branch
    %17 = sbr.rel (0) target = $region13
  $region12: #{gcn_forward.2} parent=0 // pred_region
    _
  $region13: #{gcn_forward.2} parent=0 // pred_fallthru
    _
  // Predicated region
  $region14: #{gcn_forward.2} parent=0 // pred_check
    _
  $region15: #{gcn_forward.2} parent=0 // pred_check_branch
    %19 = sbr.rel (0) target = $region17
  $region16: #{gcn_forward.2} parent=0 // pred_region
    _
  $region17: #{gcn_forward.2} parent=0 // pred_fallthru
    _
  // Predicated region
  $region18: #{gcn_forward.2} parent=0 // pred_check
    _
  $region19: #{gcn_forward.2} parent=0 // pred_check_branch
    %21 = sbr.rel (0) target = $region21
  $region20: #{gcn_forward.2} parent=0 // pred_region
    _
  $region21: #{gcn_forward.2} parent=0 // pred_fallthru
    _
  %p22 = scmp.eq.s32.totalorder 0, 0
  // Predicated region
  $region22: #{gcn_forward.2} parent=0 // pred_check
    %p23 = pneg %p22
  $region23: #{gcn_forward.2} parent=0 // pred_check_branch
    %25 = sbr.rel (%p23) target = $region25
  $region24: #{gcn_forward.2} parent=0 // pred_region
    %26 = vst [vmem:[#allocation2] sm:$0xff] 0.0
    %27 = vst [vmem:[#allocation2 + $0x8] sm:$0xff] 0.0
    %28 = vst [vmem:[#allocation2 + $0x10] sm:$0xff] 0.0
    %29 = vst [vmem:[#allocation2 + $0x18] sm:$0xff] 0.0
    %30 = vst [vmem:[#allocation2 + $0x20] sm:$0xff] 0.0
    %31 = vst [vmem:[#allocation2 + $0x28] sm:$0xff] 0.0
    %32 = vst [vmem:[#allocation2 + $0x30] sm:$0xff] 0.0
    %33 = vst [vmem:[#allocation2 + $0x38] sm:$0xff] 0.0
    %34 = vst [vmem:[#allocation2 + $0x40] sm:$0xff] 0.0
    %35 = vst [vmem:[#allocation2 + $0x48] sm:$0xff] 0.0
    %36 = vst [vmem:[#allocation2 + $0x50] sm:$0xff] 0.0
    %37 = vst [vmem:[#allocation2 + $0x58] sm:$0xff] 0.0
    %38 = vst [vmem:[#allocation2 + $0x60] sm:$0xff] 0.0
    %39 = vst [vmem:[#allocation2 + $0x68] sm:$0xff] 0.0
    %40 = vst [vmem:[#allocation2 + $0x70] sm:$0xff] 0.0
    %41 = vst [vmem:[#allocation2 + $0x78] sm:$0xff] 0.0
  $region25: #{gcn_forward.2} parent=0 // pred_fallthru
    _
  %v42 = vld [vmem:[#allocation2] sm:$0xff]
  %v43 = vld [vmem:[#allocation2 + $0x8] sm:$0xff]
  %v44 = vld [vmem:[#allocation2 + $0x10] sm:$0xff]
  %v45 = vld [vmem:[#allocation2 + $0x18] sm:$0xff]
  %v46 = vld [vmem:[#allocation2 + $0x20] sm:$0xff]
  %v47 = vld [vmem:[#allocation2 + $0x28] sm:$0xff]
  %v48 = vld [vmem:[#allocation2 + $0x30] sm:$0xff]
  %v49 = vld [vmem:[#allocation2 + $0x38] sm:$0xff]
  %v50 = vld [vmem:[#allocation2 + $0x40] sm:$0xff]
  %v51 = vld [vmem:[#allocation2 + $0x48] sm:$0xff]
  %v52 = vld [vmem:[#allocation2 + $0x50] sm:$0xff]
  %v53 = vld [vmem:[#allocation2 + $0x58] sm:$0xff]
  %v54 = vld [vmem:[#allocation2 + $0x60] sm:$0xff]
  %v55 = vld [vmem:[#allocation2 + $0x68] sm:$0xff]
  %v56 = vld [vmem:[#allocation2 + $0x70] sm:$0xff]
  %v57 = vld [vmem:[#allocation2 + $0x78] sm:$0xff]
  %v58 = vld [vmem:[%s0] sm:$0xff]
  %v59 = vld [vmem:[%s0 + $0x8] sm:$0xff]
  %v60 = vld [vmem:[%s0 + $0x10] sm:$0xff]
  %v61 = vld [vmem:[%s0 + $0x18] sm:$0xff]
  %v62 = vld [vmem:[%s0 + $0x20] sm:$0xff]
  %v63 = vld [vmem:[%s0 + $0x28] sm:$0xff]
  %v64 = vld [vmem:[%s0 + $0x30] sm:$0xff]
  %v65 = vld [vmem:[%s0 + $0x38] sm:$0xff]
  %v66 = vld [vmem:[%s0 + $0x40] sm:$0xff]
  %v67 = vld [vmem:[%s0 + $0x48] sm:$0xff]
  %v68 = vld [vmem:[%s0 + $0x50] sm:$0xff]
  %v69 = vld [vmem:[%s0 + $0x58] sm:$0xff]
  %v70 = vld [vmem:[%s0 + $0x60] sm:$0xff]
  %v71 = vld [vmem:[%s0 + $0x68] sm:$0xff]
  %v72 = vld [vmem:[%s0 + $0x70] sm:$0xff]
  %v73 = vld [vmem:[%s0 + $0x78] sm:$0xff]
  %v74 = vld [vmem:[%s1] sm:$0xff]
  %v75 = vld [vmem:[%s1 + $0x8] sm:$0xff]
  %v76 = vld [vmem:[%s1 + $0x10] sm:$0xff]
  %v77 = vld [vmem:[%s1 + $0x18] sm:$0xff]
  %v78 = vld [vmem:[%s1 + $0x20] sm:$0xff]
  %v79 = vld [vmem:[%s1 + $0x28] sm:$0xff]
  %v80 = vld [vmem:[%s1 + $0x30] sm:$0xff]
  %v81 = vld [vmem:[%s1 + $0x38] sm:$0xff]
  %v82 = vld [vmem:[%s1 + $0x40] sm:$0xff]
  %v83 = vld [vmem:[%s1 + $0x48] sm:$0xff]
  %v84 = vld [vmem:[%s1 + $0x50] sm:$0xff]
  %v85 = vld [vmem:[%s1 + $0x58] sm:$0xff]
  %v86 = vld [vmem:[%s1 + $0x60] sm:$0xff]
  %v87 = vld [vmem:[%s1 + $0x68] sm:$0xff]
  %v88 = vld [vmem:[%s1 + $0x70] sm:$0xff]
  %v89 = vld [vmem:[%s1 + $0x78] sm:$0xff]
  %90 = vmatpush.msra.mxu0 %v89
  %91 = vmatpush.msra.mxu0 %v88
  %92 = vmatpush.msra.mxu0 %v87
  %93 = vmatpush.msra.mxu0 %v86
  %94 = vmatpush.msra.mxu0 %v85
  %95 = vmatpush.msra.mxu0 %v84
  %96 = vmatpush.msra.mxu0 %v83
  %97 = vmatpush.msra.mxu0 %v82
  %98 = vmatpush.msra.mxu0 %v81
  %99 = vmatpush.msra.mxu0 %v80
  %100 = vmatpush.msra.mxu0 %v79
  %101 = vmatpush.msra.mxu0 %v78
  %102 = vmatpush.msra.mxu0 %v77
  %103 = vmatpush.msra.mxu0 %v76
  %104 = vmatpush.msra.mxu0 %v75
  %105 = vmatpush.msra.mxu0 %v74
  %106 = vmatmul.f32.gmra.mxu0 %v58
  %v107 = vpop.f32.mrf.mxu0
  %v108 = vadd.f32 0.0, %v107
  %109 = vmatmul.f32.gmra.mxu0 %v59
  %v110 = vpop.f32.mrf.mxu0
  %v111 = vadd.f32 0.0, %v110
  %112 = vmatmul.f32.gmra.mxu0 %v60
  %v113 = vpop.f32.mrf.mxu0
  %v114 = vadd.f32 0.0, %v113
  %115 = vmatmul.f32.gmra.mxu0 %v61
  %v116 = vpop.f32.mrf.mxu0
  %v117 = vadd.f32 0.0, %v116
  %118 = vmatmul.f32.gmra.mxu0 %v62
  %v119 = vpop.f32.mrf.mxu0
  %v120 = vadd.f32 0.0, %v119
  %121 = vmatmul.f32.gmra.mxu0 %v63
  %v122 = vpop.f32.mrf.mxu0
  %v123 = vadd.f32 0.0, %v122
  %124 = vmatmul.f32.gmra.mxu0 %v64
  %v125 = vpop.f32.mrf.mxu0
  %v126 = vadd.f32 0.0, %v125
  %127 = vmatmul.f32.gmra.mxu0 %v65
  %v128 = vpop.f32.mrf.mxu0
  %v129 = vadd.f32 0.0, %v128
  %130 = vmatmul.f32.gmra.mxu0 %v66
  %v131 = vpop.f32.mrf.mxu0
  %v132 = vadd.f32 0.0, %v131
  %133 = vmatmul.f32.gmra.mxu0 %v67
  %v134 = vpop.f32.mrf.mxu0
  %v135 = vadd.f32 0.0, %v134
  %136 = vmatmul.f32.gmra.mxu0 %v68
  %v137 = vpop.f32.mrf.mxu0
  %v138 = vadd.f32 0.0, %v137
  %139 = vmatmul.f32.gmra.mxu0 %v69
  %v140 = vpop.f32.mrf.mxu0
  %v141 = vadd.f32 0.0, %v140
  %142 = vmatmul.f32.gmra.mxu0 %v70
  %v143 = vpop.f32.mrf.mxu0
  %v144 = vadd.f32 0.0, %v143
  %145 = vmatmul.f32.gmra.mxu0 %v71
  %v146 = vpop.f32.mrf.mxu0
  %v147 = vadd.f32 0.0, %v146
  %148 = vmatmul.f32.gmra.mxu0 %v72
  %v149 = vpop.f32.mrf.mxu0
  %v150 = vadd.f32 0.0, %v149
  %151 = vmatmul.f32.gmra.mxu0 %v73
  %v152 = vpop.f32.mrf.mxu0
  %v153 = vadd.f32 0.0, %v152
  %154 = vdwg.mxu0
  %v155 = vadd.f32 %v42, %v108
  %v156 = vadd.f32 %v43, %v111
  %v157 = vadd.f32 %v44, %v114
  %v158 = vadd.f32 %v45, %v117
  %v159 = vadd.f32 %v46, %v120
  %v160 = vadd.f32 %v47, %v123
  %v161 = vadd.f32 %v48, %v126
  %v162 = vadd.f32 %v49, %v129
  %v163 = vadd.f32 %v50, %v132
  %v164 = vadd.f32 %v51, %v135
  %v165 = vadd.f32 %v52, %v138
  %v166 = vadd.f32 %v53, %v141
  %v167 = vadd.f32 %v54, %v144
  %v168 = vadd.f32 %v55, %v147
  %v169 = vadd.f32 %v56, %v150
  %v170 = vadd.f32 %v57, %v153
  %171 = vst [vmem:[#allocation2] sm:$0xff] %v155
  %172 = vst [vmem:[#allocation2 + $0x8] sm:$0xff] %v156
  %173 = vst [vmem:[#allocation2 + $0x10] sm:$0xff] %v157
  %174 = vst [vmem:[#allocation2 + $0x18] sm:$0xff] %v158
  %175 = vst [vmem:[#allocation2 + $0x20] sm:$0xff] %v159
  %176 = vst [vmem:[#allocation2 + $0x28] sm:$0xff] %v160
  %177 = vst [vmem:[#allocation2 + $0x30] sm:$0xff] %v161
  %178 = vst [vmem:[#allocation2 + $0x38] sm:$0xff] %v162
  %179 = vst [vmem:[#allocation2 + $0x40] sm:$0xff] %v163
  %180 = vst [vmem:[#allocation2 + $0x48] sm:$0xff] %v164
  %181 = vst [vmem:[#allocation2 + $0x50] sm:$0xff] %v165
  %182 = vst [vmem:[#allocation2 + $0x58] sm:$0xff] %v166
  %183 = vst [vmem:[#allocation2 + $0x60] sm:$0xff] %v167
  %184 = vst [vmem:[#allocation2 + $0x68] sm:$0xff] %v168
  %185 = vst [vmem:[#allocation2 + $0x70] sm:$0xff] %v169
  %186 = vst [vmem:[#allocation2 + $0x78] sm:$0xff] %v170
  // Predicated region
  $region26: #{gcn_forward.2} parent=0 // pred_check
    %p187 = pneg %p22
  $region27: #{gcn_forward.2} parent=0 // pred_check_branch
    %189 = sbr.rel (%p187) target = $region29
  $region28: #{gcn_forward.2} parent=0 // pred_region
    %v190 = vld [vmem:[#allocation2] sm:$0xff]
    %v191 = vld [vmem:[#allocation2 + $0x8] sm:$0xff]
    %v192 = vld [vmem:[#allocation2 + $0x10] sm:$0xff]
    %v193 = vld [vmem:[#allocation2 + $0x18] sm:$0xff]
    %v194 = vld [vmem:[#allocation2 + $0x20] sm:$0xff]
    %v195 = vld [vmem:[#allocation2 + $0x28] sm:$0xff]
    %v196 = vld [vmem:[#allocation2 + $0x30] sm:$0xff]
    %v197 = vld [vmem:[#allocation2 + $0x38] sm:$0xff]
    %v198 = vld [vmem:[#allocation2 + $0x40] sm:$0xff]
    %v199 = vld [vmem:[#allocation2 + $0x48] sm:$0xff]
    %v200 = vld [vmem:[#allocation2 + $0x50] sm:$0xff]
    %v201 = vld [vmem:[#allocation2 + $0x58] sm:$0xff]
    %v202 = vld [vmem:[#allocation2 + $0x60] sm:$0xff]
    %v203 = vld [vmem:[#allocation2 + $0x68] sm:$0xff]
    %v204 = vld [vmem:[#allocation2 + $0x70] sm:$0xff]
    %v205 = vld [vmem:[#allocation2 + $0x78] sm:$0xff]
    %v206 = vld [vmem:[%s2] sm:$0xff]
    %v207 = vld [vmem:[%s2 + $0x8] sm:$0xff]
    %v208 = vld [vmem:[%s2 + $0x10] sm:$0xff]
    %v209 = vld [vmem:[%s2 + $0x18] sm:$0xff]
    %v210 = vld [vmem:[%s2 + $0x20] sm:$0xff]
    %v211 = vld [vmem:[%s2 + $0x28] sm:$0xff]
    %v212 = vld [vmem:[%s2 + $0x30] sm:$0xff]
    %v213 = vld [vmem:[%s2 + $0x38] sm:$0xff]
    %v214 = vld [vmem:[%s2 + $0x40] sm:$0xff]
    %v215 = vld [vmem:[%s2 + $0x48] sm:$0xff]
    %v216 = vld [vmem:[%s2 + $0x50] sm:$0xff]
    %v217 = vld [vmem:[%s2 + $0x58] sm:$0xff]
    %v218 = vld [vmem:[%s2 + $0x60] sm:$0xff]
    %v219 = vld [vmem:[%s2 + $0x68] sm:$0xff]
    %v220 = vld [vmem:[%s2 + $0x70] sm:$0xff]
    %v221 = vld [vmem:[%s2 + $0x78] sm:$0xff]
    %222 = vmatpush.msra.mxu0 %v221
    %223 = vmatpush.msra.mxu0 %v220
    %224 = vmatpush.msra.mxu0 %v219
    %225 = vmatpush.msra.mxu0 %v218
    %226 = vmatpush.msra.mxu0 %v217
    %227 = vmatpush.msra.mxu0 %v216
    %228 = vmatpush.msra.mxu0 %v215
    %229 = vmatpush.msra.mxu0 %v214
    %230 = vmatpush.msra.mxu0 %v213
    %231 = vmatpush.msra.mxu0 %v212
    %232 = vmatpush.msra.mxu0 %v211
    %233 = vmatpush.msra.mxu0 %v210
    %234 = vmatpush.msra.mxu0 %v209
    %235 = vmatpush.msra.mxu0 %v208
    %236 = vmatpush.msra.mxu0 %v207
    %237 = vmatpush.msra.mxu0 %v206
    %238 = vmatmul.f32.gmra.mxu0 %v190
    %v239 = vpop.f32.mrf.mxu0
    %v240 = vadd.f32 0.0, %v239
    %241 = vmatmul.f32.gmra.mxu0 %v191
    %v242 = vpop.f32.mrf.mxu0
    %v243 = vadd.f32 0.0, %v242
    %244 = vmatmul.f32.gmra.mxu0 %v192
    %v245 = vpop.f32.mrf.mxu0
    %v246 = vadd.f32 0.0, %v245
    %247 = vmatmul.f32.gmra.mxu0 %v193
    %v248 = vpop.f32.mrf.mxu0
    %v249 = vadd.f32 0.0, %v248
    %250 = vmatmul.f32.gmra.mxu0 %v194
    %v251 = vpop.f32.mrf.mxu0
    %v252 = vadd.f32 0.0, %v251
    %253 = vmatmul.f32.gmra.mxu0 %v195
    %v254 = vpop.f32.mrf.mxu0
    %v255 = vadd.f32 0.0, %v254
    %256 = vmatmul.f32.gmra.mxu0 %v196
    %v257 = vpop.f32.mrf.mxu0
    %v258 = vadd.f32 0.0, %v257
    %259 = vmatmul.f32.gmra.mxu0 %v197
    %v260 = vpop.f32.mrf.mxu0
    %v261 = vadd.f32 0.0, %v260
    %262 = vmatmul.f32.gmra.mxu0 %v198
    %v263 = vpop.f32.mrf.mxu0
    %v264 = vadd.f32 0.0, %v263
    %265 = vmatmul.f32.gmra.mxu0 %v199
    %v266 = vpop.f32.mrf.mxu0
    %v267 = vadd.f32 0.0, %v266
    %268 = vmatmul.f32.gmra.mxu0 %v200
    %v269 = vpop.f32.mrf.mxu0
    %v270 = vadd.f32 0.0, %v269
    %271 = vmatmul.f32.gmra.mxu0 %v201
    %v272 = vpop.f32.mrf.mxu0
    %v273 = vadd.f32 0.0, %v272
    %274 = vmatmul.f32.gmra.mxu0 %v202
    %v275 = vpop.f32.mrf.mxu0
    %v276 = vadd.f32 0.0, %v275
    %277 = vmatmul.f32.gmra.mxu0 %v203
    %v278 = vpop.f32.mrf.mxu0
    %v279 = vadd.f32 0.0, %v278
    %280 = vmatmul.f32.gmra.mxu0 %v204
    %v281 = vpop.f32.mrf.mxu0
    %v282 = vadd.f32 0.0, %v281
    %283 = vmatmul.f32.gmra.mxu0 %v205
    %v284 = vpop.f32.mrf.mxu0
    %v285 = vadd.f32 0.0, %v284
    %286 = vdwg.mxu0
    %v287 = vmax.f32 %v240, 0.0
    %v288 = vmax.f32 %v243, 0.0
    %v289 = vmax.f32 %v246, 0.0
    %v290 = vmax.f32 %v249, 0.0
    %v291 = vmax.f32 %v252, 0.0
    %v292 = vmax.f32 %v255, 0.0
    %v293 = vmax.f32 %v258, 0.0
    %v294 = vmax.f32 %v261, 0.0
    %v295 = vmax.f32 %v264, 0.0
    %v296 = vmax.f32 %v267, 0.0
    %v297 = vmax.f32 %v270, 0.0
    %v298 = vmax.f32 %v273, 0.0
    %v299 = vmax.f32 %v276, 0.0
    %v300 = vmax.f32 %v279, 0.0
    %v301 = vmax.f32 %v282, 0.0
    %v302 = vmax.f32 %v285, 0.0
    %303 = vst [vmem:[%s5] sm:$0xff] %v287
    %304 = vst [vmem:[%s5 + $0x8] sm:$0xff] %v288
    %305 = vst [vmem:[%s5 + $0x10] sm:$0xff] %v289
    %306 = vst [vmem:[%s5 + $0x18] sm:$0xff] %v290
    %307 = vst [vmem:[%s5 + $0x20] sm:$0xff] %v291
    %308 = vst [vmem:[%s5 + $0x28] sm:$0xff] %v292
    %309 = vst [vmem:[%s5 + $0x30] sm:$0xff] %v293
    %310 = vst [vmem:[%s5 + $0x38] sm:$0xff] %v294
    %311 = vst [vmem:[%s5 + $0x40] sm:$0xff] %v295
    %312 = vst [vmem:[%s5 + $0x48] sm:$0xff] %v296
    %313 = vst [vmem:[%s5 + $0x50] sm:$0xff] %v297
    %314 = vst [vmem:[%s5 + $0x58] sm:$0xff] %v298
    %315 = vst [vmem:[%s5 + $0x60] sm:$0xff] %v299
    %316 = vst [vmem:[%s5 + $0x68] sm:$0xff] %v300
    %317 = vst [vmem:[%s5 + $0x70] sm:$0xff] %v301
    %318 = vst [vmem:[%s5 + $0x78] sm:$0xff] %v302
    %v319 = vld [vmem:[%s3] sm:$0xff]
    %v320 = vld [vmem:[%s3 + $0x8] sm:$0xff]
    %v321 = vld [vmem:[%s3 + $0x10] sm:$0xff]
    %v322 = vld [vmem:[%s3 + $0x18] sm:$0xff]
    %v323 = vld [vmem:[%s3 + $0x20] sm:$0xff]
    %v324 = vld [vmem:[%s3 + $0x28] sm:$0xff]
    %v325 = vld [vmem:[%s3 + $0x30] sm:$0xff]
    %v326 = vld [vmem:[%s3 + $0x38] sm:$0xff]
    %v327 = vld [vmem:[%s3 + $0x40] sm:$0xff]
    %v328 = vld [vmem:[%s3 + $0x48] sm:$0xff]
    %v329 = vld [vmem:[%s3 + $0x50] sm:$0xff]
    %v330 = vld [vmem:[%s3 + $0x58] sm:$0xff]
    %v331 = vld [vmem:[%s3 + $0x60] sm:$0xff]
    %v332 = vld [vmem:[%s3 + $0x68] sm:$0xff]
    %v333 = vld [vmem:[%s3 + $0x70] sm:$0xff]
    %v334 = vld [vmem:[%s3 + $0x78] sm:$0xff]
    %v335 = vld [vmem:[%s4] sm:$0x1]
    %v337 = vperm.slane %v335, 0
    %339 = vmatpush.msra.mxu0 %v334
    %340 = vmatpush.msra.mxu0 %v333
    %341 = vmatpush.msra.mxu0 %v332
    %342 = vmatpush.msra.mxu0 %v331
    %343 = vmatpush.msra.mxu0 %v330
    %344 = vmatpush.msra.mxu0 %v329
    %345 = vmatpush.msra.mxu0 %v328
    %346 = vmatpush.msra.mxu0 %v327
    %347 = vmatpush.msra.mxu0 %v326
    %348 = vmatpush.msra.mxu0 %v325
    %349 = vmatpush.msra.mxu0 %v324
    %350 = vmatpush.msra.mxu0 %v323
    %351 = vmatpush.msra.mxu0 %v322
    %352 = vmatpush.msra.mxu0 %v321
    %353 = vmatpush.msra.mxu0 %v320
    %354 = vmatpush.msra.mxu0 %v319
    %355 = vmatmul.f32.gmra.mxu0 %v287
    %v356 = vpop.f32.mrf.mxu0
    %v357 = vadd.f32 %v337, %v356
    %358 = vmatmul.f32.gmra.mxu0 %v288
    %v359 = vpop.f32.mrf.mxu0
    %v360 = vadd.f32 %v337, %v359
    %361 = vmatmul.f32.gmra.mxu0 %v289
    %v362 = vpop.f32.mrf.mxu0
    %v363 = vadd.f32 %v337, %v362
    %364 = vmatmul.f32.gmra.mxu0 %v290
    %v365 = vpop.f32.mrf.mxu0
    %v366 = vadd.f32 %v337, %v365
    %367 = vmatmul.f32.gmra.mxu0 %v291
    %v368 = vpop.f32.mrf.mxu0
    %v369 = vadd.f32 %v337, %v368
    %370 = vmatmul.f32.gmra.mxu0 %v292
    %v371 = vpop.f32.mrf.mxu0
    %v372 = vadd.f32 %v337, %v371
    %373 = vmatmul.f32.gmra.mxu0 %v293
    %v374 = vpop.f32.mrf.mxu0
    %v375 = vadd.f32 %v337, %v374
    %376 = vmatmul.f32.gmra.mxu0 %v294
    %v377 = vpop.f32.mrf.mxu0
    %v378 = vadd.f32 %v337, %v377
    %379 = vmatmul.f32.gmra.mxu0 %v295
    %v380 = vpop.f32.mrf.mxu0
    %v381 = vadd.f32 %v337, %v380
    %382 = vmatmul.f32.gmra.mxu0 %v296
    %v383 = vpop.f32.mrf.mxu0
    %v384 = vadd.f32 %v337, %v383
    %385 = vmatmul.f32.gmra.mxu0 %v297
    %v386 = vpop.f32.mrf.mxu0
    %v387 = vadd.f32 %v337, %v386
    %388 = vmatmul.f32.gmra.mxu0 %v298
    %v389 = vpop.f32.mrf.mxu0
    %v390 = vadd.f32 %v337, %v389
    %391 = vmatmul.f32.gmra.mxu0 %v299
    %v392 = vpop.f32.mrf.mxu0
    %v393 = vadd.f32 %v337, %v392
    %394 = vmatmul.f32.gmra.mxu0 %v300
    %v395 = vpop.f32.mrf.mxu0
    %v396 = vadd.f32 %v337, %v395
    %397 = vmatmul.f32.gmra.mxu0 %v301
    %v398 = vpop.f32.mrf.mxu0
    %v399 = vadd.f32 %v337, %v398
    %400 = vmatmul.f32.gmra.mxu0 %v302
    %v401 = vpop.f32.mrf.mxu0
    %v402 = vadd.f32 %v337, %v401
    %403 = vdwg.mxu0
    %404 = vst [vmem:[%s6] sm:$0xff] %v357
    %405 = vst [vmem:[%s6 + $0x8] sm:$0xff] %v360
    %406 = vst [vmem:[%s6 + $0x10] sm:$0xff] %v363
    %407 = vst [vmem:[%s6 + $0x18] sm:$0xff] %v366
    %408 = vst [vmem:[%s6 + $0x20] sm:$0xff] %v369
    %409 = vst [vmem:[%s6 + $0x28] sm:$0xff] %v372
    %410 = vst [vmem:[%s6 + $0x30] sm:$0xff] %v375
    %411 = vst [vmem:[%s6 + $0x38] sm:$0xff] %v378
    %412 = vst [vmem:[%s6 + $0x40] sm:$0xff] %v381
    %413 = vst [vmem:[%s6 + $0x48] sm:$0xff] %v384
    %414 = vst [vmem:[%s6 + $0x50] sm:$0xff] %v387
    %415 = vst [vmem:[%s6 + $0x58] sm:$0xff] %v390
    %416 = vst [vmem:[%s6 + $0x60] sm:$0xff] %v393
    %417 = vst [vmem:[%s6 + $0x68] sm:$0xff] %v396
    %418 = vst [vmem:[%s6 + $0x70] sm:$0xff] %v399
    %419 = vst [vmem:[%s6 + $0x78] sm:$0xff] %v402
  $region29: #{gcn_forward.2} parent=0 // pred_fallthru
    _
  // Predicated region
  $region30: #{gcn_forward.2} parent=0 // pred_check
    _
  $region31: #{gcn_forward.2} parent=0 // pred_check_branch
    %421 = sbr.rel (0) target = $region33
  $region32: #{gcn_forward.2} parent=0 // pred_region
    _
  $region33: #{gcn_forward.2} parent=0 // pred_fallthru
    _
  // Predicated region
  $region34: #{gcn_forward.2} parent=0 // pred_check
    _
  $region35: #{gcn_forward.2} parent=0 // pred_check_branch
    %423 = sbr.rel (0) target = $region37
  $region36: #{gcn_forward.2} parent=0 // pred_region
    _
  $region37: #{gcn_forward.2} parent=0 // pred_fallthru
    _
  // Predicated region
  $region38: #{gcn_forward.2} parent=0 // pred_check
    _
  $region39: #{gcn_forward.2} parent=0 // pred_check_branch
    %425 = sbr.rel (0) target = $region41
  $region40: #{gcn_forward.2} parent=0 // pred_region
    _
  $region41: #{gcn_forward.2} parent=0 // pred_fallthru
    _
  // Predicated region
  $region42: #{gcn_forward.2} parent=0 // pred_check
    _
  $region43: #{gcn_forward.2} parent=0 // pred_check_branch
    %427 = sbr.rel (0) target = $region45
  $region44: #{gcn_forward.2} parent=0 // pred_region
    _
  $region45: #{gcn_forward.2} parent=0 // pred_fallthru
    _

// kernel: gcn_forward.3
$region0: #{gcn_forward.3}
  #allocation0 [shape = 'u32[]', space=smem, size = 0x4, offset = 0x4, fixed_abs, tag = 'smem constant byte address 0x4 - core index']
  #allocation1 [shape = 'u32[72,128]{1,0:T(1,128)}', space=vmem, size = 0x9000, scoped, tag = 'internal scratch']
  #allocation2 [shape = 'f32[128,128]{1,0:T(8,128)}', space=vmem, size = 0x10000, scoped, tag = 'scratch operand']
  %s0 = inlined_call_operand.vmem [shape: f32[128,128], index: 0, kind: input, shape index: {}]
  %s1 = inlined_call_operand.vmem [shape: f32[128,128], index: 1, kind: input, shape index: {}]
  %s2 = inlined_call_operand.vmem [shape: f32[128,128], index: 2, kind: input, shape index: {}]
  %s3 = inlined_call_operand.vmem [shape: f32[128,128], index: 3, kind: input, shape index: {}]
  %s4 = inlined_call_operand.vmem [shape: f32[1,128], index: 4, kind: input, shape index: {}]
  %s5 = inlined_call_operand.vmem [shape: f32[128,128], index: 5, kind: output, shape index: {}]
  %s6 = sld [smem:[#allocation0]]
  $region38: #{gcn_forward.3} parent=0
    _
  %s8 = ssub.s32 1, %s6
  %s9 = scalar_select 0, %s8, %s6
  // Predicated region
  $region2: #{gcn_forward.3} parent=0 // pred_check
    _
  $region3: #{gcn_forward.3} parent=0 // pred_check_branch
    %11 = sbr.rel (0) target = $region5
  $region4: #{gcn_forward.3} parent=0 // pred_region
    _
  $region5: #{gcn_forward.3} parent=0 // pred_fallthru
    _
  // Predicated region
  $region6: #{gcn_forward.3} parent=0 // pred_check
    _
  $region7: #{gcn_forward.3} parent=0 // pred_check_branch
    %13 = sbr.rel (0) target = $region9
  $region8: #{gcn_forward.3} parent=0 // pred_region
    _
  $region9: #{gcn_forward.3} parent=0 // pred_fallthru
    _
  // Predicated region
  $region10: #{gcn_forward.3} parent=0 // pred_check
    _
  $region11: #{gcn_forward.3} parent=0 // pred_check_branch
    %15 = sbr.rel (0) target = $region13
  $region12: #{gcn_forward.3} parent=0 // pred_region
    _
  $region13: #{gcn_forward.3} parent=0 // pred_fallthru
    _
  // Predicated region
  $region14: #{gcn_forward.3} parent=0 // pred_check
    _
  $region15: #{gcn_forward.3} parent=0 // pred_check_branch
    %17 = sbr.rel (0) target = $region17
  $region16: #{gcn_forward.3} parent=0 // pred_region
    _
  $region17: #{gcn_forward.3} parent=0 // pred_fallthru
    _
  // Predicated region
  $region18: #{gcn_forward.3} parent=0 // pred_check
    _
  $region19: #{gcn_forward.3} parent=0 // pred_check_branch
    %19 = sbr.rel (0) target = $region21
  $region20: #{gcn_forward.3} parent=0 // pred_region
    _
  $region21: #{gcn_forward.3} parent=0 // pred_fallthru
    _
  %p20 = scmp.eq.s32.totalorder 0, 0
  // Predicated region
  $region22: #{gcn_forward.3} parent=0 // pred_check
    %p21 = pneg %p20
  $region23: #{gcn_forward.3} parent=0 // pred_check_branch
    %23 = sbr.rel (%p21) target = $region25
  $region24: #{gcn_forward.3} parent=0 // pred_region
    %24 = vst [vmem:[#allocation2] sm:$0xff] 0.0
    %25 = vst [vmem:[#allocation2 + $0x8] sm:$0xff] 0.0
    %26 = vst [vmem:[#allocation2 + $0x10] sm:$0xff] 0.0
    %27 = vst [vmem:[#allocation2 + $0x18] sm:$0xff] 0.0
    %28 = vst [vmem:[#allocation2 + $0x20] sm:$0xff] 0.0
    %29 = vst [vmem:[#allocation2 + $0x28] sm:$0xff] 0.0
    %30 = vst [vmem:[#allocation2 + $0x30] sm:$0xff] 0.0
    %31 = vst [vmem:[#allocation2 + $0x38] sm:$0xff] 0.0
    %32 = vst [vmem:[#allocation2 + $0x40] sm:$0xff] 0.0
    %33 = vst [vmem:[#allocation2 + $0x48] sm:$0xff] 0.0
    %34 = vst [vmem:[#allocation2 + $0x50] sm:$0xff] 0.0
    %35 = vst [vmem:[#allocation2 + $0x58] sm:$0xff] 0.0
    %36 = vst [vmem:[#allocation2 + $0x60] sm:$0xff] 0.0
    %37 = vst [vmem:[#allocation2 + $0x68] sm:$0xff] 0.0
    %38 = vst [vmem:[#allocation2 + $0x70] sm:$0xff] 0.0
    %39 = vst [vmem:[#allocation2 + $0x78] sm:$0xff] 0.0
  $region25: #{gcn_forward.3} parent=0 // pred_fallthru
    _
  %v40 = vld [vmem:[#allocation2] sm:$0xff]
  %v41 = vld [vmem:[#allocation2 + $0x8] sm:$0xff]
  %v42 = vld [vmem:[#allocation2 + $0x10] sm:$0xff]
  %v43 = vld [vmem:[#allocation2 + $0x18] sm:$0xff]
  %v44 = vld [vmem:[#allocation2 + $0x20] sm:$0xff]
  %v45 = vld [vmem:[#allocation2 + $0x28] sm:$0xff]
  %v46 = vld [vmem:[#allocation2 + $0x30] sm:$0xff]
  %v47 = vld [vmem:[#allocation2 + $0x38] sm:$0xff]
  %v48 = vld [vmem:[#allocation2 + $0x40] sm:$0xff]
  %v49 = vld [vmem:[#allocation2 + $0x48] sm:$0xff]
  %v50 = vld [vmem:[#allocation2 + $0x50] sm:$0xff]
  %v51 = vld [vmem:[#allocation2 + $0x58] sm:$0xff]
  %v52 = vld [vmem:[#allocation2 + $0x60] sm:$0xff]
  %v53 = vld [vmem:[#allocation2 + $0x68] sm:$0xff]
  %v54 = vld [vmem:[#allocation2 + $0x70] sm:$0xff]
  %v55 = vld [vmem:[#allocation2 + $0x78] sm:$0xff]
  %v56 = vld [vmem:[%s0] sm:$0xff]
  %v57 = vld [vmem:[%s0 + $0x8] sm:$0xff]
  %v58 = vld [vmem:[%s0 + $0x10] sm:$0xff]
  %v59 = vld [vmem:[%s0 + $0x18] sm:$0xff]
  %v60 = vld [vmem:[%s0 + $0x20] sm:$0xff]
  %v61 = vld [vmem:[%s0 + $0x28] sm:$0xff]
  %v62 = vld [vmem:[%s0 + $0x30] sm:$0xff]
  %v63 = vld [vmem:[%s0 + $0x38] sm:$0xff]
  %v64 = vld [vmem:[%s0 + $0x40] sm:$0xff]
  %v65 = vld [vmem:[%s0 + $0x48] sm:$0xff]
  %v66 = vld [vmem:[%s0 + $0x50] sm:$0xff]
  %v67 = vld [vmem:[%s0 + $0x58] sm:$0xff]
  %v68 = vld [vmem:[%s0 + $0x60] sm:$0xff]
  %v69 = vld [vmem:[%s0 + $0x68] sm:$0xff]
  %v70 = vld [vmem:[%s0 + $0x70] sm:$0xff]
  %v71 = vld [vmem:[%s0 + $0x78] sm:$0xff]
  %v72 = vld [vmem:[%s1] sm:$0xff]
  %v73 = vld [vmem:[%s1 + $0x8] sm:$0xff]
  %v74 = vld [vmem:[%s1 + $0x10] sm:$0xff]
  %v75 = vld [vmem:[%s1 + $0x18] sm:$0xff]
  %v76 = vld [vmem:[%s1 + $0x20] sm:$0xff]
  %v77 = vld [vmem:[%s1 + $0x28] sm:$0xff]
  %v78 = vld [vmem:[%s1 + $0x30] sm:$0xff]
  %v79 = vld [vmem:[%s1 + $0x38] sm:$0xff]
  %v80 = vld [vmem:[%s1 + $0x40] sm:$0xff]
  %v81 = vld [vmem:[%s1 + $0x48] sm:$0xff]
  %v82 = vld [vmem:[%s1 + $0x50] sm:$0xff]
  %v83 = vld [vmem:[%s1 + $0x58] sm:$0xff]
  %v84 = vld [vmem:[%s1 + $0x60] sm:$0xff]
  %v85 = vld [vmem:[%s1 + $0x68] sm:$0xff]
  %v86 = vld [vmem:[%s1 + $0x70] sm:$0xff]
  %v87 = vld [vmem:[%s1 + $0x78] sm:$0xff]
  %88 = vmatpush.msra.mxu0 %v87
  %89 = vmatpush.msra.mxu0 %v86
  %90 = vmatpush.msra.mxu0 %v85
  %91 = vmatpush.msra.mxu0 %v84
  %92 = vmatpush.msra.mxu0 %v83
  %93 = vmatpush.msra.mxu0 %v82
  %94 = vmatpush.msra.mxu0 %v81
  %95 = vmatpush.msra.mxu0 %v80
  %96 = vmatpush.msra.mxu0 %v79
  %97 = vmatpush.msra.mxu0 %v78
  %98 = vmatpush.msra.mxu0 %v77
  %99 = vmatpush.msra.mxu0 %v76
  %100 = vmatpush.msra.mxu0 %v75
  %101 = vmatpush.msra.mxu0 %v74
  %102 = vmatpush.msra.mxu0 %v73
  %103 = vmatpush.msra.mxu0 %v72
  %104 = vmatmul.f32.gmra.mxu0 %v56
  %v105 = vpop.f32.mrf.mxu0
  %v106 = vadd.f32 0.0, %v105
  %107 = vmatmul.f32.gmra.mxu0 %v57
  %v108 = vpop.f32.mrf.mxu0
  %v109 = vadd.f32 0.0, %v108
  %110 = vmatmul.f32.gmra.mxu0 %v58
  %v111 = vpop.f32.mrf.mxu0
  %v112 = vadd.f32 0.0, %v111
  %113 = vmatmul.f32.gmra.mxu0 %v59
  %v114 = vpop.f32.mrf.mxu0
  %v115 = vadd.f32 0.0, %v114
  %116 = vmatmul.f32.gmra.mxu0 %v60
  %v117 = vpop.f32.mrf.mxu0
  %v118 = vadd.f32 0.0, %v117
  %119 = vmatmul.f32.gmra.mxu0 %v61
  %v120 = vpop.f32.mrf.mxu0
  %v121 = vadd.f32 0.0, %v120
  %122 = vmatmul.f32.gmra.mxu0 %v62
  %v123 = vpop.f32.mrf.mxu0
  %v124 = vadd.f32 0.0, %v123
  %125 = vmatmul.f32.gmra.mxu0 %v63
  %v126 = vpop.f32.mrf.mxu0
  %v127 = vadd.f32 0.0, %v126
  %128 = vmatmul.f32.gmra.mxu0 %v64
  %v129 = vpop.f32.mrf.mxu0
  %v130 = vadd.f32 0.0, %v129
  %131 = vmatmul.f32.gmra.mxu0 %v65
  %v132 = vpop.f32.mrf.mxu0
  %v133 = vadd.f32 0.0, %v132
  %134 = vmatmul.f32.gmra.mxu0 %v66
  %v135 = vpop.f32.mrf.mxu0
  %v136 = vadd.f32 0.0, %v135
  %137 = vmatmul.f32.gmra.mxu0 %v67
  %v138 = vpop.f32.mrf.mxu0
  %v139 = vadd.f32 0.0, %v138
  %140 = vmatmul.f32.gmra.mxu0 %v68
  %v141 = vpop.f32.mrf.mxu0
  %v142 = vadd.f32 0.0, %v141
  %143 = vmatmul.f32.gmra.mxu0 %v69
  %v144 = vpop.f32.mrf.mxu0
  %v145 = vadd.f32 0.0, %v144
  %146 = vmatmul.f32.gmra.mxu0 %v70
  %v147 = vpop.f32.mrf.mxu0
  %v148 = vadd.f32 0.0, %v147
  %149 = vmatmul.f32.gmra.mxu0 %v71
  %v150 = vpop.f32.mrf.mxu0
  %v151 = vadd.f32 0.0, %v150
  %152 = vdwg.mxu0
  %v153 = vadd.f32 %v40, %v106
  %v154 = vadd.f32 %v41, %v109
  %v155 = vadd.f32 %v42, %v112
  %v156 = vadd.f32 %v43, %v115
  %v157 = vadd.f32 %v44, %v118
  %v158 = vadd.f32 %v45, %v121
  %v159 = vadd.f32 %v46, %v124
  %v160 = vadd.f32 %v47, %v127
  %v161 = vadd.f32 %v48, %v130
  %v162 = vadd.f32 %v49, %v133
  %v163 = vadd.f32 %v50, %v136
  %v164 = vadd.f32 %v51, %v139
  %v165 = vadd.f32 %v52, %v142
  %v166 = vadd.f32 %v53, %v145
  %v167 = vadd.f32 %v54, %v148
  %v168 = vadd.f32 %v55, %v151
  %169 = vst [vmem:[#allocation2] sm:$0xff] %v153
  %170 = vst [vmem:[#allocation2 + $0x8] sm:$0xff] %v154
  %171 = vst [vmem:[#allocation2 + $0x10] sm:$0xff] %v155
  %172 = vst [vmem:[#allocation2 + $0x18] sm:$0xff] %v156
  %173 = vst [vmem:[#allocation2 + $0x20] sm:$0xff] %v157
  %174 = vst [vmem:[#allocation2 + $0x28] sm:$0xff] %v158
  %175 = vst [vmem:[#allocation2 + $0x30] sm:$0xff] %v159
  %176 = vst [vmem:[#allocation2 + $0x38] sm:$0xff] %v160
  %177 = vst [vmem:[#allocation2 + $0x40] sm:$0xff] %v161
  %178 = vst [vmem:[#allocation2 + $0x48] sm:$0xff] %v162
  %179 = vst [vmem:[#allocation2 + $0x50] sm:$0xff] %v163
  %180 = vst [vmem:[#allocation2 + $0x58] sm:$0xff] %v164
  %181 = vst [vmem:[#allocation2 + $0x60] sm:$0xff] %v165
  %182 = vst [vmem:[#allocation2 + $0x68] sm:$0xff] %v166
  %183 = vst [vmem:[#allocation2 + $0x70] sm:$0xff] %v167
  %184 = vst [vmem:[#allocation2 + $0x78] sm:$0xff] %v168
  // Predicated region
  $region26: #{gcn_forward.3} parent=0 // pred_check
    %p185 = pneg %p20
  $region27: #{gcn_forward.3} parent=0 // pred_check_branch
    %187 = sbr.rel (%p185) target = $region29
  $region28: #{gcn_forward.3} parent=0 // pred_region
    %v188 = vld [vmem:[#allocation2] sm:$0xff]
    %v189 = vld [vmem:[#allocation2 + $0x8] sm:$0xff]
    %v190 = vld [vmem:[#allocation2 + $0x10] sm:$0xff]
    %v191 = vld [vmem:[#allocation2 + $0x18] sm:$0xff]
    %v192 = vld [vmem:[#allocation2 + $0x20] sm:$0xff]
    %v193 = vld [vmem:[#allocation2 + $0x28] sm:$0xff]
    %v194 = vld [vmem:[#allocation2 + $0x30] sm:$0xff]
    %v195 = vld [vmem:[#allocation2 + $0x38] sm:$0xff]
    %v196 = vld [vmem:[#allocation2 + $0x40] sm:$0xff]
    %v197 = vld [vmem:[#allocation2 + $0x48] sm:$0xff]
    %v198 = vld [vmem:[#allocation2 + $0x50] sm:$0xff]
    %v199 = vld [vmem:[#allocation2 + $0x58] sm:$0xff]
    %v200 = vld [vmem:[#allocation2 + $0x60] sm:$0xff]
    %v201 = vld [vmem:[#allocation2 + $0x68] sm:$0xff]
    %v202 = vld [vmem:[#allocation2 + $0x70] sm:$0xff]
    %v203 = vld [vmem:[#allocation2 + $0x78] sm:$0xff]
    %v204 = vmax.f32 %v188, 0.0
    %v205 = vmax.f32 %v189, 0.0
    %v206 = vmax.f32 %v190, 0.0
    %v207 = vmax.f32 %v191, 0.0
    %v208 = vmax.f32 %v192, 0.0
    %v209 = vmax.f32 %v193, 0.0
    %v210 = vmax.f32 %v194, 0.0
    %v211 = vmax.f32 %v195, 0.0
    %v212 = vmax.f32 %v196, 0.0
    %v213 = vmax.f32 %v197, 0.0
    %v214 = vmax.f32 %v198, 0.0
    %v215 = vmax.f32 %v199, 0.0
    %v216 = vmax.f32 %v200, 0.0
    %v217 = vmax.f32 %v201, 0.0
    %v218 = vmax.f32 %v202, 0.0
    %v219 = vmax.f32 %v203, 0.0
    %v220 = vld [vmem:[%s2] sm:$0xff]
    %v221 = vld [vmem:[%s2 + $0x8] sm:$0xff]
    %v222 = vld [vmem:[%s2 + $0x10] sm:$0xff]
    %v223 = vld [vmem:[%s2 + $0x18] sm:$0xff]
    %v224 = vld [vmem:[%s2 + $0x20] sm:$0xff]
    %v225 = vld [vmem:[%s2 + $0x28] sm:$0xff]
    %v226 = vld [vmem:[%s2 + $0x30] sm:$0xff]
    %v227 = vld [vmem:[%s2 + $0x38] sm:$0xff]
    %v228 = vld [vmem:[%s2 + $0x40] sm:$0xff]
    %v229 = vld [vmem:[%s2 + $0x48] sm:$0xff]
    %v230 = vld [vmem:[%s2 + $0x50] sm:$0xff]
    %v231 = vld [vmem:[%s2 + $0x58] sm:$0xff]
    %v232 = vld [vmem:[%s2 + $0x60] sm:$0xff]
    %v233 = vld [vmem:[%s2 + $0x68] sm:$0xff]
    %v234 = vld [vmem:[%s2 + $0x70] sm:$0xff]
    %v235 = vld [vmem:[%s2 + $0x78] sm:$0xff]
    %v236 = vadd.f32 %v220, %v204
    %v237 = vadd.f32 %v221, %v205
    %v238 = vadd.f32 %v222, %v206
    %v239 = vadd.f32 %v223, %v207
    %v240 = vadd.f32 %v224, %v208
    %v241 = vadd.f32 %v225, %v209
    %v242 = vadd.f32 %v226, %v210
    %v243 = vadd.f32 %v227, %v211
    %v244 = vadd.f32 %v228, %v212
    %v245 = vadd.f32 %v229, %v213
    %v246 = vadd.f32 %v230, %v214
    %v247 = vadd.f32 %v231, %v215
    %v248 = vadd.f32 %v232, %v216
    %v249 = vadd.f32 %v233, %v217
    %v250 = vadd.f32 %v234, %v218
    %v251 = vadd.f32 %v235, %v219
    %v252 = vld [vmem:[%s3] sm:$0xff]
    %v253 = vld [vmem:[%s3 + $0x8] sm:$0xff]
    %v254 = vld [vmem:[%s3 + $0x10] sm:$0xff]
    %v255 = vld [vmem:[%s3 + $0x18] sm:$0xff]
    %v256 = vld [vmem:[%s3 + $0x20] sm:$0xff]
    %v257 = vld [vmem:[%s3 + $0x28] sm:$0xff]
    %v258 = vld [vmem:[%s3 + $0x30] sm:$0xff]
    %v259 = vld [vmem:[%s3 + $0x38] sm:$0xff]
    %v260 = vld [vmem:[%s3 + $0x40] sm:$0xff]
    %v261 = vld [vmem:[%s3 + $0x48] sm:$0xff]
    %v262 = vld [vmem:[%s3 + $0x50] sm:$0xff]
    %v263 = vld [vmem:[%s3 + $0x58] sm:$0xff]
    %v264 = vld [vmem:[%s3 + $0x60] sm:$0xff]
    %v265 = vld [vmem:[%s3 + $0x68] sm:$0xff]
    %v266 = vld [vmem:[%s3 + $0x70] sm:$0xff]
    %v267 = vld [vmem:[%s3 + $0x78] sm:$0xff]
    %v268 = vld [vmem:[%s4] sm:$0x1]
    %v270 = vperm.slane %v268, 0
    %272 = vmatpush.msra.mxu0 %v267
    %273 = vmatpush.msra.mxu0 %v266
    %274 = vmatpush.msra.mxu0 %v265
    %275 = vmatpush.msra.mxu0 %v264
    %276 = vmatpush.msra.mxu0 %v263
    %277 = vmatpush.msra.mxu0 %v262
    %278 = vmatpush.msra.mxu0 %v261
    %279 = vmatpush.msra.mxu0 %v260
    %280 = vmatpush.msra.mxu0 %v259
    %281 = vmatpush.msra.mxu0 %v258
    %282 = vmatpush.msra.mxu0 %v257
    %283 = vmatpush.msra.mxu0 %v256
    %284 = vmatpush.msra.mxu0 %v255
    %285 = vmatpush.msra.mxu0 %v254
    %286 = vmatpush.msra.mxu0 %v253
    %287 = vmatpush.msra.mxu0 %v252
    %288 = vmatmul.f32.gmra.mxu0 %v236
    %v289 = vpop.f32.mrf.mxu0
    %v290 = vadd.f32 %v270, %v289
    %291 = vmatmul.f32.gmra.mxu0 %v237
    %v292 = vpop.f32.mrf.mxu0
    %v293 = vadd.f32 %v270, %v292
    %294 = vmatmul.f32.gmra.mxu0 %v238
    %v295 = vpop.f32.mrf.mxu0
    %v296 = vadd.f32 %v270, %v295
    %297 = vmatmul.f32.gmra.mxu0 %v239
    %v298 = vpop.f32.mrf.mxu0
    %v299 = vadd.f32 %v270, %v298
    %300 = vmatmul.f32.gmra.mxu0 %v240
    %v301 = vpop.f32.mrf.mxu0
    %v302 = vadd.f32 %v270, %v301
    %303 = vmatmul.f32.gmra.mxu0 %v241
    %v304 = vpop.f32.mrf.mxu0
    %v305 = vadd.f32 %v270, %v304
    %306 = vmatmul.f32.gmra.mxu0 %v242
    %v307 = vpop.f32.mrf.mxu0
    %v308 = vadd.f32 %v270, %v307
    %309 = vmatmul.f32.gmra.mxu0 %v243
    %v310 = vpop.f32.mrf.mxu0
    %v311 = vadd.f32 %v270, %v310
    %312 = vmatmul.f32.gmra.mxu0 %v244
    %v313 = vpop.f32.mrf.mxu0
    %v314 = vadd.f32 %v270, %v313
    %315 = vmatmul.f32.gmra.mxu0 %v245
    %v316 = vpop.f32.mrf.mxu0
    %v317 = vadd.f32 %v270, %v316
    %318 = vmatmul.f32.gmra.mxu0 %v246
    %v319 = vpop.f32.mrf.mxu0
    %v320 = vadd.f32 %v270, %v319
    %321 = vmatmul.f32.gmra.mxu0 %v247
    %v322 = vpop.f32.mrf.mxu0
    %v323 = vadd.f32 %v270, %v322
    %324 = vmatmul.f32.gmra.mxu0 %v248
    %v325 = vpop.f32.mrf.mxu0
    %v326 = vadd.f32 %v270, %v325
    %327 = vmatmul.f32.gmra.mxu0 %v249
    %v328 = vpop.f32.mrf.mxu0
    %v329 = vadd.f32 %v270, %v328
    %330 = vmatmul.f32.gmra.mxu0 %v250
    %v331 = vpop.f32.mrf.mxu0
    %v332 = vadd.f32 %v270, %v331
    %333 = vmatmul.f32.gmra.mxu0 %v251
    %v334 = vpop.f32.mrf.mxu0
    %v335 = vadd.f32 %v270, %v334
    %336 = vdwg.mxu0
    %337 = vst [vmem:[%s5] sm:$0xff] %v290
    %338 = vst [vmem:[%s5 + $0x8] sm:$0xff] %v293
    %339 = vst [vmem:[%s5 + $0x10] sm:$0xff] %v296
    %340 = vst [vmem:[%s5 + $0x18] sm:$0xff] %v299
    %341 = vst [vmem:[%s5 + $0x20] sm:$0xff] %v302
    %342 = vst [vmem:[%s5 + $0x28] sm:$0xff] %v305
    %343 = vst [vmem:[%s5 + $0x30] sm:$0xff] %v308
    %344 = vst [vmem:[%s5 + $0x38] sm:$0xff] %v311
    %345 = vst [vmem:[%s5 + $0x40] sm:$0xff] %v314
    %346 = vst [vmem:[%s5 + $0x48] sm:$0xff] %v317
    %347 = vst [vmem:[%s5 + $0x50] sm:$0xff] %v320
    %348 = vst [vmem:[%s5 + $0x58] sm:$0xff] %v323
    %349 = vst [vmem:[%s5 + $0x60] sm:$0xff] %v326
    %350 = vst [vmem:[%s5 + $0x68] sm:$0xff] %v329
    %351 = vst [vmem:[%s5 + $0x70] sm:$0xff] %v332
    %352 = vst [vmem:[%s5 + $0x78] sm:$0xff] %v335
  $region29: #{gcn_forward.3} parent=0 // pred_fallthru
    _
  // Predicated region
  $region30: #{gcn_forward.3} parent=0 // pred_check
    _
  $region31: #{gcn_forward.3} parent=0 // pred_check_branch
    %354 = sbr.rel (0) target = $region33
  $region32: #{gcn_forward.3} parent=0 // pred_region
    _
  $region33: #{gcn_forward.3} parent=0 // pred_fallthru
    _
  // Predicated region
  $region34: #{gcn_forward.3} parent=0 // pred_check
    _
  $region35: #{gcn_forward.3} parent=0 // pred_check_branch
    %356 = sbr.rel (0) target = $region37
  $region36: #{gcn_forward.3} parent=0 // pred_region
    _
  $region37: #{gcn_forward.3} parent=0 // pred_fallthru
    _

</llo_original>
